<compile_context>
chip_gen: v5e
topology: v5e:2x2
jax: 0.10.0
libtpu: 0.0.40
codegen_flags: <defaults>
</compile_context>

<pallas_src>
import functools

import jax
import jax.numpy as jnp
from jax.experimental import pallas as pl
from jax.experimental.pallas import tpu as pltpu


def _round_up(x, m):
    return ((x + m - 1) // m) * m


# ----------------------------- Pallas kernel --------------------------------

def prototype_kernel(
    x_ref, pos_ref,                      # per-point inputs
    w0_ref, b0_ref,                      # backbone trunk stand-in MLP
    wh_ref, bh_ref,                      # fused heads: [sem(C) | obj(1) | vgen conv1 * bn1-scale (D)]
    w2_ref, b2_ref,                      # vgen conv2 (bn2 scale folded) + bn2 shift
    w3_ref, b3_ref,                      # vgen conv3, xyz columns only (D, 3)
    out_ref,                             # packed output: [sem | obj | votes | pad]
    *, num_classes,
):
    C = num_classes

    x = x_ref[...]

    # Backbone per-point features (stand-in for the KPFCNN trunk output).
    feats = jnp.dot(x, w0_ref[...], preferred_element_type=jnp.float32) + b0_ref[...]
    feats = jnp.maximum(feats, 0.0)

    # One fused matmul for the three heads sharing `feats` as LHS:
    #   columns [0, C)      -> point_semantic_classes logits
    #   column  [C, C+1)    -> point_objectness_scores
    #   columns [C+1, C+1+D)-> vgen conv1 (bn1 scale pre-folded into the weight)
    fused = jnp.dot(feats, wh_ref[...], preferred_element_type=jnp.float32) + bh_ref[...]
    h1 = jnp.maximum(fused[:, C + 1:], 0.0)            # relu(bn1(conv1(f)))

    h2 = jnp.dot(h1, w2_ref[...], preferred_element_type=jnp.float32) + b2_ref[...]
    h2 = jnp.maximum(h2, 0.0)                           # relu(bn2(conv2(net)))

    # conv3 xyz columns only -> vote offsets; vote_xyz = seed_xyz + offset.
    offset = jnp.dot(h2, w3_ref[...], preferred_element_type=jnp.float32) + b3_ref[...]
    votes = pos_ref[...] + offset

    # Single packed, lane-contiguous output slab (one writeback stream per tile).
    out_ref[...] = jnp.zeros_like(out_ref)              # clear pad lanes
    out_ref[:, :C + 1] = fused[:, :C + 1]               # sem logits | objectness
    out_ref[:, C + 1:C + 4] = votes                     # vote xyz


# ------------------------------ wrapper --------------------------------------

def prototype_forward(x, pos, params, *, tile_n=512):
    """Runs the fused PrototypeNet forward kernel.

    Args:
      x:   (N, F_in) float32  per-point input features.
      pos: (N, 3)    float32  per-point positions (batch.points[0]).
      params: dict of weights (see init_params).
    Returns:
      (point_semantic_classes (N, C),
       point_votes            (1, N, 3),
       point_objectness_scores (N, 1))
    """
    N, f_in = x.shape
    D = params["w0"].shape[1]
    C = params["wc"].shape[1]

    # ---------------- host-side weight prep ----------------
    # Fold BN scales into the conv weights; fuse the three shared-LHS heads into
    # one wide weight; trim the dead columns of conv3.
    wh = jnp.concatenate(
        [params["wc"], params["wo"], params["w1"] * params["s1"]], axis=1)   # (D, C+1+D)
    bh = jnp.concatenate([params["bc"], params["bo"], params["t1"]], axis=1)  # (1, C+1+D)
    w2f = params["w2"] * params["s2"]                                         # (D, D)
    b2f = params["t2"]                                                        # (1, D)
    w3x = params["w3"][:, :3]                                                 # (D, 3)
    b3x = params["b3"][:, :3]                                                 # (1, 3)
    weights = [params["w0"], params["b0"], wh, bh, w2f, b2f, w3x, b3x]

    # ---------------- tiling ----------------
    pack_w = _round_up(C + 1 + 3, 8)            # [sem | obj | votes | pad]
    tile_n = min(tile_n, _round_up(N, 8))       # small N -> single tile, grid=(1,)
    n_pad = _round_up(N, tile_n)
    if n_pad != N:
        x = jnp.pad(x, ((0, n_pad - N), (0, 0)))
        pos = jnp.pad(pos, ((0, n_pad - N), (0, 0)))
    grid = (n_pad // tile_n,)

    def tile_spec(width):
        return pl.BlockSpec((tile_n, width), lambda i: (i, 0))

    def full_spec(arr):
        return pl.BlockSpec(arr.shape, lambda i: (0, 0))

    grid_spec = pltpu.PrefetchScalarGridSpec(
        num_scalar_prefetch=0,
        grid=grid,
        in_specs=[tile_spec(f_in), tile_spec(3)] + [full_spec(w) for w in weights],
        out_specs=tile_spec(pack_w),
    )

    packed = pl.pallas_call(
        functools.partial(prototype_kernel, num_classes=C),
        grid_spec=grid_spec,
        out_shape=jax.ShapeDtypeStruct((n_pad, pack_w), jnp.float32),
        compiler_params=pltpu.CompilerParams(
            dimension_semantics=("parallel",)),
    )(x, pos, *weights)

    sem = packed[:N, :C]
    obj = packed[:N, C:C + 1]
    votes = packed[:N, C + 1:C + 4]

    # Glue: forward() unsqueezes positions/features before vgen; votes -> (1, N, 3).
    return sem, votes[None, :, :], obj


# ------------------------- deterministic init --------------------------------

def init_params(key, f_in, feat_dim, num_classes):
    ks = jax.random.split(key, 10)
    D = feat_dim

    def lin(k, shape, scale=0.1):
        return scale * jax.random.normal(k, shape, dtype=jnp.float32)

    # BatchNorm1d (eval mode) folded: s = gamma / sqrt(var + eps),
    # t = (conv_bias - running_mean) * s + beta
    eps = 1e-5
    gamma1 = jnp.full((1, D), 1.1, jnp.float32)
    beta1 = jnp.full((1, D), 0.05, jnp.float32)
    mean1 = jnp.full((1, D), 0.02, jnp.float32)
    var1 = jnp.full((1, D), 0.9, jnp.float32)
    b1_conv = lin(ks[7], (1, D))
    s1 = gamma1 / jnp.sqrt(var1 + eps)
    t1 = (b1_conv - mean1) * s1 + beta1

    gamma2 = jnp.full((1, D), 0.95, jnp.float32)
    beta2 = jnp.full((1, D), -0.03, jnp.float32)
    mean2 = jnp.full((1, D), -0.01, jnp.float32)
    var2 = jnp.full((1, D), 1.2, jnp.float32)
    b2_conv = lin(ks[8], (1, D))
    s2 = gamma2 / jnp.sqrt(var2 + eps)
    t2 = (b2_conv - mean2) * s2 + beta2

    return {
        # backbone trunk stand-in + heads
        "w0": lin(ks[0], (f_in, D)),
        "b0": lin(ks[1], (1, D)),
        "wc": lin(ks[2], (D, num_classes)),
        "bc": jnp.zeros((1, num_classes), jnp.float32),
        "wo": lin(ks[3], (D, 1)),
        "bo": jnp.zeros((1, 1), jnp.float32),
        # VotingModule
        "w1": lin(ks[4], (D, D)),
        "s1": s1, "t1": t1,
        "w2": lin(ks[5], (D, D)),
        "s2": s2, "t2": t2,
        "w3": lin(ks[6], (D, 3 + D)),
        "b3": lin(ks[9], (1, 3 + D)),
    }


def reference_forward(x, pos, p):
    """Pure-JAX reference of the same computation (for validation)."""
    hp = functools.partial(jnp.dot, precision=jax.lax.Precision.HIGHEST)
    feats = jnp.maximum(hp(x, p["w0"]) + p["b0"], 0.0)
    sem = hp(feats, p["wc"]) + p["bc"]
    obj = hp(feats, p["wo"]) + p["bo"]
    h1 = jnp.maximum(hp(feats, p["w1"]) * p["s1"] + p["t1"], 0.0)
    h2 = jnp.maximum(hp(h1, p["w2"]) * p["s2"] + p["t2"], 0.0)
    net3 = hp(h2, p["w3"]) + p["b3"]
    votes = pos + net3[:, 0:3]
    return sem, votes[None, :, :], obj


# --------------------------------- main ---------------------------------------

if __name__ == "__main__":
    N = 128          # number of points
    F_IN = 4         # raw per-point input feature dim
    FEAT_DIM = 32    # config.first_features_dim
    NUM_CLASSES = 8  # len(lbl_values) - len(ign_lbls)

    key = jax.random.PRNGKey(0)
    kx, kp, kw = jax.random.split(key, 3)
    x = jax.random.normal(kx, (N, F_IN), dtype=jnp.float32)
    pos = jax.random.normal(kp, (N, 3), dtype=jnp.float32)
    params = init_params(kw, F_IN, FEAT_DIM, NUM_CLASSES)

    sem, votes, obj = prototype_forward(x, pos, params)
    jax.block_until_ready((sem, votes, obj))

    sem_r, votes_r, obj_r = reference_forward(x, pos, params)
    assert sem.shape == (N, NUM_CLASSES)
    assert votes.shape == (1, N, 3)
    assert obj.shape == (N, 1)
    assert jnp.allclose(sem, sem_r, rtol=1e-3, atol=1e-3)
    assert jnp.allclose(votes, votes_r, rtol=1e-3, atol=1e-3)
    assert jnp.allclose(obj, obj_r, rtol=1e-3, atol=1e-3)

    print("KERNEL_OK")
</pallas_src>

<mosaic_0001>
module attributes {stable_mosaic.version = 11 : i64} {
  func.func @prototype_kernel(%arg0: i32, %arg1: memref<128x4xf32, #tpu.memory_space<vmem>>, %arg2: memref<128x3xf32, #tpu.memory_space<vmem>>, %arg3: memref<4x32xf32, #tpu.memory_space<vmem>>, %arg4: memref<1x32xf32, #tpu.memory_space<vmem>>, %arg5: memref<32x41xf32, #tpu.memory_space<vmem>>, %arg6: memref<1x41xf32, #tpu.memory_space<vmem>>, %arg7: memref<32x32xf32, #tpu.memory_space<vmem>>, %arg8: memref<1x32xf32, #tpu.memory_space<vmem>>, %arg9: memref<32x3xf32, #tpu.memory_space<vmem>>, %arg10: memref<1x3xf32, #tpu.memory_space<vmem>>, %arg11: memref<128x16xf32, #tpu.memory_space<vmem>>) attributes {dimension_semantics = [#tpu.dimension_semantics<parallel>], iteration_bounds = array<i64: 1>, scalar_prefetch = 0 : i64, scratch_operands = 0 : i64, tpu.core_type = #tpu.core_type<tc>, window_params = [{transform_indices = @transform_0, window_bounds = array<i64: 128, 4>}, {transform_indices = @transform_1, window_bounds = array<i64: 128, 3>}, {pipeline_mode = #tpu.pipeline_mode<synchronous>, transform_indices = @transform_2, window_bounds = array<i64: 4, 32>}, {pipeline_mode = #tpu.pipeline_mode<synchronous>, transform_indices = @transform_3, window_bounds = array<i64: 1, 32>}, {pipeline_mode = #tpu.pipeline_mode<synchronous>, transform_indices = @transform_4, window_bounds = array<i64: 32, 41>}, {pipeline_mode = #tpu.pipeline_mode<synchronous>, transform_indices = @transform_5, window_bounds = array<i64: 1, 41>}, {pipeline_mode = #tpu.pipeline_mode<synchronous>, transform_indices = @transform_6, window_bounds = array<i64: 32, 32>}, {pipeline_mode = #tpu.pipeline_mode<synchronous>, transform_indices = @transform_7, window_bounds = array<i64: 1, 32>}, {pipeline_mode = #tpu.pipeline_mode<synchronous>, transform_indices = @transform_8, window_bounds = array<i64: 32, 3>}, {pipeline_mode = #tpu.pipeline_mode<synchronous>, transform_indices = @transform_9, window_bounds = array<i64: 1, 3>}, {transform_indices = @transform_10, window_bounds = array<i64: 128, 16>}]} {
    %c0 = arith.constant 0 : index
    %c0_0 = arith.constant 0 : index
    %0 = vector.load %arg1[%c0, %c0_0] : memref<128x4xf32, #tpu.memory_space<vmem>>, vector<128x4xf32>
    %c0_1 = arith.constant 0 : index
    %c0_2 = arith.constant 0 : index
    %1 = vector.load %arg3[%c0_1, %c0_2] : memref<4x32xf32, #tpu.memory_space<vmem>>, vector<4x32xf32>
    %cst = arith.constant dense<0.000000e+00> : vector<128x32xf32>
    %2 = tpu.matmul %0, %1, %cst {dimension_numbers = #tpu.dot_dimension_numbers<[1], [0], [0], [1], [0, 0, 1, 1], [], []>} : vector<128x4xf32>, vector<4x32xf32>, vector<128x32xf32> -> vector<128x32xf32>
    %c0_3 = arith.constant 0 : index
    %c0_4 = arith.constant 0 : index
    %3 = vector.load %arg4[%c0_3, %c0_4] : memref<1x32xf32, #tpu.memory_space<vmem>>, vector<1x32xf32>
    %4 = vector.broadcast %3 : vector<1x32xf32> to vector<128x32xf32>
    %5 = arith.addf %2, %4 : vector<128x32xf32>
    %cst_5 = arith.constant 0.000000e+00 : f32
    %6 = vector.broadcast %cst_5 : f32 to vector<128x32xf32>
    %7 = arith.maximumf %5, %6 : vector<128x32xf32>
    %c0_6 = arith.constant 0 : index
    %c0_7 = arith.constant 0 : index
    %8 = vector.load %arg5[%c0_6, %c0_7] : memref<32x41xf32, #tpu.memory_space<vmem>>, vector<32x41xf32>
    %cst_8 = arith.constant dense<0.000000e+00> : vector<128x41xf32>
    %9 = tpu.matmul %7, %8, %cst_8 {dimension_numbers = #tpu.dot_dimension_numbers<[1], [0], [0], [1], [0, 0, 1, 1], [], []>} : vector<128x32xf32>, vector<32x41xf32>, vector<128x41xf32> -> vector<128x41xf32>
    %c0_9 = arith.constant 0 : index
    %c0_10 = arith.constant 0 : index
    %10 = vector.load %arg6[%c0_9, %c0_10] : memref<1x41xf32, #tpu.memory_space<vmem>>, vector<1x41xf32>
    %11 = vector.broadcast %10 : vector<1x41xf32> to vector<128x41xf32>
    %12 = arith.addf %9, %11 : vector<128x41xf32>
    %13 = vector.extract_strided_slice %12 {offsets = [0, 9], sizes = [128, 32], strides = [1, 1]} : vector<128x41xf32> to vector<128x32xf32>
    %cst_11 = arith.constant 0.000000e+00 : f32
    %14 = vector.broadcast %cst_11 : f32 to vector<128x32xf32>
    %15 = arith.maximumf %13, %14 : vector<128x32xf32>
    %c0_12 = arith.constant 0 : index
    %c0_13 = arith.constant 0 : index
    %16 = vector.load %arg7[%c0_12, %c0_13] : memref<32x32xf32, #tpu.memory_space<vmem>>, vector<32x32xf32>
    %cst_14 = arith.constant dense<0.000000e+00> : vector<128x32xf32>
    %17 = tpu.matmul %15, %16, %cst_14 {dimension_numbers = #tpu.dot_dimension_numbers<[1], [0], [0], [1], [0, 0, 1, 1], [], []>} : vector<128x32xf32>, vector<32x32xf32>, vector<128x32xf32> -> vector<128x32xf32>
    %c0_15 = arith.constant 0 : index
    %c0_16 = arith.constant 0 : index
    %18 = vector.load %arg8[%c0_15, %c0_16] : memref<1x32xf32, #tpu.memory_space<vmem>>, vector<1x32xf32>
    %19 = vector.broadcast %18 : vector<1x32xf32> to vector<128x32xf32>
    %20 = arith.addf %17, %19 : vector<128x32xf32>
    %cst_17 = arith.constant 0.000000e+00 : f32
    %21 = vector.broadcast %cst_17 : f32 to vector<128x32xf32>
    %22 = arith.maximumf %20, %21 : vector<128x32xf32>
    %c0_18 = arith.constant 0 : index
    %c0_19 = arith.constant 0 : index
    %23 = vector.load %arg9[%c0_18, %c0_19] : memref<32x3xf32, #tpu.memory_space<vmem>>, vector<32x3xf32>
    %cst_20 = arith.constant dense<0.000000e+00> : vector<128x3xf32>
    %24 = tpu.matmul %22, %23, %cst_20 {dimension_numbers = #tpu.dot_dimension_numbers<[1], [0], [0], [1], [0, 0, 1, 1], [], []>} : vector<128x32xf32>, vector<32x3xf32>, vector<128x3xf32> -> vector<128x3xf32>
    %c0_21 = arith.constant 0 : index
    %c0_22 = arith.constant 0 : index
    %25 = vector.load %arg10[%c0_21, %c0_22] : memref<1x3xf32, #tpu.memory_space<vmem>>, vector<1x3xf32>
    %26 = vector.broadcast %25 : vector<1x3xf32> to vector<128x3xf32>
    %27 = arith.addf %24, %26 : vector<128x3xf32>
    %c0_23 = arith.constant 0 : index
    %c0_24 = arith.constant 0 : index
    %28 = vector.load %arg2[%c0_23, %c0_24] : memref<128x3xf32, #tpu.memory_space<vmem>>, vector<128x3xf32>
    %29 = arith.addf %28, %27 : vector<128x3xf32>
    %cst_25 = arith.constant 0.000000e+00 : f32
    %30 = vector.broadcast %cst_25 : f32 to vector<128x16xf32>
    %c0_26 = arith.constant 0 : index
    %c0_27 = arith.constant 0 : index
    %31 = vector.load %arg11[%c0_26, %c0_27] : memref<128x16xf32, #tpu.memory_space<vmem>>, vector<128x16xf32>
    tpu.vector_store %arg11[%c0_26, %c0_27], %30 {strides = array<i32>} : memref<128x16xf32, #tpu.memory_space<vmem>>, vector<128x16xf32>,
    %32 = vector.extract_strided_slice %12 {offsets = [0, 0], sizes = [128, 9], strides = [1, 1]} : vector<128x41xf32> to vector<128x9xf32>
    %c0_28 = arith.constant 0 : index
    %c0_29 = arith.constant 0 : index
    %33 = vector.load %arg11[%c0_28, %c0_29] : memref<128x16xf32, #tpu.memory_space<vmem>>, vector<128x9xf32>
    tpu.vector_store %arg11[%c0_28, %c0_29], %32 {strides = array<i32>} : memref<128x16xf32, #tpu.memory_space<vmem>>, vector<128x9xf32>,
    %c0_30 = arith.constant 0 : index
    %c9 = arith.constant 9 : index
    %34 = vector.load %arg11[%c0_30, %c9] : memref<128x16xf32, #tpu.memory_space<vmem>>, vector<128x3xf32>
    tpu.vector_store %arg11[%c0_30, %c9], %29 {strides = array<i32>} : memref<128x16xf32, #tpu.memory_space<vmem>>, vector<128x3xf32>,
    return
  }
  func.func @transform_0(%arg0: i32) -> (i32, i32) {
    %c0_i32 = arith.constant 0 : i32
    %c0_i32_0 = arith.constant 0 : i32
    return %arg0, %c0_i32 : i32, i32
  }
  func.func @transform_1(%arg0: i32) -> (i32, i32) {
    %c0_i32 = arith.constant 0 : i32
    %c0_i32_0 = arith.constant 0 : i32
    return %arg0, %c0_i32 : i32, i32
  }
  func.func @transform_2(%arg0: i32) -> (i32, i32) {
    %c0_i32 = arith.constant 0 : i32
    %c0_i32_0 = arith.constant 0 : i32
    %c0_i32_1 = arith.constant 0 : i32
    return %c0_i32, %c0_i32_0 : i32, i32
  }
  func.func @transform_3(%arg0: i32) -> (i32, i32) {
    %c0_i32 = arith.constant 0 : i32
    %c0_i32_0 = arith.constant 0 : i32
    %c0_i32_1 = arith.constant 0 : i32
    return %c0_i32, %c0_i32_0 : i32, i32
  }
  func.func @transform_4(%arg0: i32) -> (i32, i32) {
    %c0_i32 = arith.constant 0 : i32
    %c0_i32_0 = arith.constant 0 : i32
    %c0_i32_1 = arith.constant 0 : i32
    return %c0_i32, %c0_i32_0 : i32, i32
  }
  func.func @transform_5(%arg0: i32) -> (i32, i32) {
    %c0_i32 = arith.constant 0 : i32
    %c0_i32_0 = arith.constant 0 : i32
    %c0_i32_1 = arith.constant 0 : i32
    return %c0_i32, %c0_i32_0 : i32, i32
  }
  func.func @transform_6(%arg0: i32) -> (i32, i32) {
    %c0_i32 = arith.constant 0 : i32
    %c0_i32_0 = arith.constant 0 : i32
    %c0_i32_1 = arith.constant 0 : i32
    return %c0_i32, %c0_i32_0 : i32, i32
  }
  func.func @transform_7(%arg0: i32) -> (i32, i32) {
    %c0_i32 = arith.constant 0 : i32
    %c0_i32_0 = arith.constant 0 : i32
    %c0_i32_1 = arith.constant 0 : i32
    return %c0_i32, %c0_i32_0 : i32, i32
  }
  func.func @transform_8(%arg0: i32) -> (i32, i32) {
    %c0_i32 = arith.constant 0 : i32
    %c0_i32_0 = arith.constant 0 : i32
    %c0_i32_1 = arith.constant 0 : i32
    return %c0_i32, %c0_i32_0 : i32, i32
  }
  func.func @transform_9(%arg0: i32) -> (i32, i32) {
    %c0_i32 = arith.constant 0 : i32
    %c0_i32_0 = arith.constant 0 : i32
    %c0_i32_1 = arith.constant 0 : i32
    return %c0_i32, %c0_i32_0 : i32, i32
  }
  func.func @transform_10(%arg0: i32) -> (i32, i32) {
    %c0_i32 = arith.constant 0 : i32
    %c0_i32_0 = arith.constant 0 : i32
    return %arg0, %c0_i32 : i32, i32
  }
}

</mosaic_0001>

<llo_original>
// kernel: tpu_custom_call.1
$region0: #{tpu_custom_call.1}
  #allocation0 [shape = 'u32[]', space=smem, size = 0x4, offset = 0x4, fixed_abs, tag = 'smem constant byte address 0x4 - core index']
  #allocation1 [shape = 'u32[72,128]{1,0:T(1,128)}', space=vmem, size = 0x9000, scoped, tag = 'internal scratch']
  %s0 = inlined_call_operand.vmem [shape: f32[128,4], index: 0, kind: input, shape index: {}]
  %s1 = inlined_call_operand.vmem [shape: f32[128,3], index: 1, kind: input, shape index: {}]
  %s2 = inlined_call_operand.vmem [shape: f32[4,32], index: 2, kind: input, shape index: {}]
  %s3 = inlined_call_operand.vmem [shape: f32[1,32], index: 3, kind: input, shape index: {}]
  %s4 = inlined_call_operand.vmem [shape: f32[32,41], index: 4, kind: input, shape index: {}]
  %s5 = inlined_call_operand.vmem [shape: f32[1,41], index: 5, kind: input, shape index: {}]
  %s6 = inlined_call_operand.vmem [shape: f32[32,32], index: 6, kind: input, shape index: {}]
  %s7 = inlined_call_operand.vmem [shape: f32[1,32], index: 7, kind: input, shape index: {}]
  %s8 = inlined_call_operand.vmem [shape: f32[32,3], index: 8, kind: input, shape index: {}]
  %s9 = inlined_call_operand.vmem [shape: f32[1,3], index: 9, kind: input, shape index: {}]
  %s10 = inlined_call_operand.vmem [shape: f32[128,16], index: 10, kind: output, shape index: {}]
  %s11 = sld [smem:[#allocation0]]
  $region50: #{tpu_custom_call.1} parent=0
    _
  %s13 = ssub.s32 1, %s11
  %s14 = scalar_select 0, %s13, %s11
  // Predicated region
  $region2: #{tpu_custom_call.1} parent=0 // pred_check
    _
  $region3: #{tpu_custom_call.1} parent=0 // pred_check_branch
    %16 = sbr.rel (0) target = $region5
  $region4: #{tpu_custom_call.1} parent=0 // pred_region
    _
  $region5: #{tpu_custom_call.1} parent=0 // pred_fallthru
    _
  // Predicated region
  $region6: #{tpu_custom_call.1} parent=0 // pred_check
    _
  $region7: #{tpu_custom_call.1} parent=0 // pred_check_branch
    %18 = sbr.rel (0) target = $region9
  $region8: #{tpu_custom_call.1} parent=0 // pred_region
    _
  $region9: #{tpu_custom_call.1} parent=0 // pred_fallthru
    _
  // Predicated region
  $region10: #{tpu_custom_call.1} parent=0 // pred_check
    _
  $region11: #{tpu_custom_call.1} parent=0 // pred_check_branch
    %20 = sbr.rel (0) target = $region13
  $region12: #{tpu_custom_call.1} parent=0 // pred_region
    _
  $region13: #{tpu_custom_call.1} parent=0 // pred_fallthru
    _
  // Predicated region
  $region14: #{tpu_custom_call.1} parent=0 // pred_check
    _
  $region15: #{tpu_custom_call.1} parent=0 // pred_check_branch
    %22 = sbr.rel (0) target = $region17
  $region16: #{tpu_custom_call.1} parent=0 // pred_region
    _
  $region17: #{tpu_custom_call.1} parent=0 // pred_fallthru
    _
  // Predicated region
  $region18: #{tpu_custom_call.1} parent=0 // pred_check
    _
  $region19: #{tpu_custom_call.1} parent=0 // pred_check_branch
    %24 = sbr.rel (0) target = $region21
  $region20: #{tpu_custom_call.1} parent=0 // pred_region
    _
  $region21: #{tpu_custom_call.1} parent=0 // pred_fallthru
    _
  // Predicated region
  $region22: #{tpu_custom_call.1} parent=0 // pred_check
    _
  $region23: #{tpu_custom_call.1} parent=0 // pred_check_branch
    %26 = sbr.rel (0) target = $region25
  $region24: #{tpu_custom_call.1} parent=0 // pred_region
    _
  $region25: #{tpu_custom_call.1} parent=0 // pred_fallthru
    _
  // Predicated region
  $region26: #{tpu_custom_call.1} parent=0 // pred_check
    _
  $region27: #{tpu_custom_call.1} parent=0 // pred_check_branch
    %28 = sbr.rel (0) target = $region29
  $region28: #{tpu_custom_call.1} parent=0 // pred_region
    _
  $region29: #{tpu_custom_call.1} parent=0 // pred_fallthru
    _
  // Predicated region
  $region30: #{tpu_custom_call.1} parent=0 // pred_check
    _
  $region31: #{tpu_custom_call.1} parent=0 // pred_check_branch
    %30 = sbr.rel (0) target = $region33
  $region32: #{tpu_custom_call.1} parent=0 // pred_region
    _
  $region33: #{tpu_custom_call.1} parent=0 // pred_fallthru
    _
  // Predicated region
  $region34: #{tpu_custom_call.1} parent=0 // pred_check
    _
  $region35: #{tpu_custom_call.1} parent=0 // pred_check_branch
    %32 = sbr.rel (0) target = $region37
  $region36: #{tpu_custom_call.1} parent=0 // pred_region
    _
  $region37: #{tpu_custom_call.1} parent=0 // pred_fallthru
    _
  // Predicated region
  $region38: #{tpu_custom_call.1} parent=0 // pred_check
    _
  $region39: #{tpu_custom_call.1} parent=0 // pred_check_branch
    %34 = sbr.rel (0) target = $region41
  $region40: #{tpu_custom_call.1} parent=0 // pred_region
    _
  $region41: #{tpu_custom_call.1} parent=0 // pred_fallthru
    _
  %v35 = vld [vmem:[%s0] sm:$0xff]
  %v36 = vld [vmem:[%s0 + $0x8] sm:$0xff]
  %v37 = vld [vmem:[%s0 + $0x10] sm:$0xff]
  %v38 = vld [vmem:[%s0 + $0x18] sm:$0xff]
  %v39 = vld [vmem:[%s0 + $0x20] sm:$0xff]
  %v40 = vld [vmem:[%s0 + $0x28] sm:$0xff]
  %v41 = vld [vmem:[%s0 + $0x30] sm:$0xff]
  %v42 = vld [vmem:[%s0 + $0x38] sm:$0xff]
  %v43 = vld [vmem:[%s0 + $0x40] sm:$0xff]
  %v44 = vld [vmem:[%s0 + $0x48] sm:$0xff]
  %v45 = vld [vmem:[%s0 + $0x50] sm:$0xff]
  %v46 = vld [vmem:[%s0 + $0x58] sm:$0xff]
  %v47 = vld [vmem:[%s0 + $0x60] sm:$0xff]
  %v48 = vld [vmem:[%s0 + $0x68] sm:$0xff]
  %v49 = vld [vmem:[%s0 + $0x70] sm:$0xff]
  %v50 = vld [vmem:[%s0 + $0x78] sm:$0xff]
  %v51 = vld [vmem:[%s2] sm:$0xf]
  %v52 = vld [vmem:[%s3] sm:$0x1]
  %v54 = vperm.slane %v52, 0
  %vm56 = vcmask 31744
  %v58 = vsel %vm56, %v35, 0
  %v61 = vsel %vm56, %v36, 0
  %v64 = vsel %vm56, %v37, 0
  %v67 = vsel %vm56, %v38, 0
  %v70 = vsel %vm56, %v39, 0
  %v73 = vsel %vm56, %v40, 0
  %v76 = vsel %vm56, %v41, 0
  %v79 = vsel %vm56, %v42, 0
  %v82 = vsel %vm56, %v43, 0
  %v85 = vsel %vm56, %v44, 0
  %v88 = vsel %vm56, %v45, 0
  %v91 = vsel %vm56, %v46, 0
  %v94 = vsel %vm56, %v47, 0
  %v97 = vsel %vm56, %v48, 0
  %v100 = vsel %vm56, %v49, 0
  %v103 = vsel %vm56, %v50, 0
  %vm105 = vcmask 1043456
  %v107 = vsel %vm105, %v51, 0
  %109 = vmatpush.msra.mxu0 0.0
  %110 = vmatpush.msra.mxu0 0.0
  %111 = vmatpush.msra.mxu0 0.0
  %112 = vmatpush.msra.mxu0 0.0
  %113 = vmatpush.msra.mxu0 0.0
  %114 = vmatpush.msra.mxu0 0.0
  %115 = vmatpush.msra.mxu0 0.0
  %116 = vmatpush.msra.mxu0 0.0
  %117 = vmatpush.msra.mxu0 0.0
  %118 = vmatpush.msra.mxu0 0.0
  %119 = vmatpush.msra.mxu0 0.0
  %120 = vmatpush.msra.mxu0 0.0
  %121 = vmatpush.msra.mxu0 0.0
  %122 = vmatpush.msra.mxu0 0.0
  %123 = vmatpush.msra.mxu0 0.0
  %124 = vmatpush.msra.mxu0 %v107
  %125 = vmatmul.f32.gmra.mxu0 %v58
  %v126 = vpop.f32.mrf.mxu0
  %v127 = vadd.f32 %v54, %v126
  %128 = vmatmul.f32.gmra.mxu0 %v61
  %v129 = vpop.f32.mrf.mxu0
  %v130 = vadd.f32 %v54, %v129
  %131 = vmatmul.f32.gmra.mxu0 %v64
  %v132 = vpop.f32.mrf.mxu0
  %v133 = vadd.f32 %v54, %v132
  %134 = vmatmul.f32.gmra.mxu0 %v67
  %v135 = vpop.f32.mrf.mxu0
  %v136 = vadd.f32 %v54, %v135
  %137 = vmatmul.f32.gmra.mxu0 %v70
  %v138 = vpop.f32.mrf.mxu0
  %v139 = vadd.f32 %v54, %v138
  %140 = vmatmul.f32.gmra.mxu0 %v73
  %v141 = vpop.f32.mrf.mxu0
  %v142 = vadd.f32 %v54, %v141
  %143 = vmatmul.f32.gmra.mxu0 %v76
  %v144 = vpop.f32.mrf.mxu0
  %v145 = vadd.f32 %v54, %v144
  %146 = vmatmul.f32.gmra.mxu0 %v79
  %v147 = vpop.f32.mrf.mxu0
  %v148 = vadd.f32 %v54, %v147
  %149 = vmatmul.f32.gmra.mxu0 %v82
  %v150 = vpop.f32.mrf.mxu0
  %v151 = vadd.f32 %v54, %v150
  %152 = vmatmul.f32.gmra.mxu0 %v85
  %v153 = vpop.f32.mrf.mxu0
  %v154 = vadd.f32 %v54, %v153
  %155 = vmatmul.f32.gmra.mxu0 %v88
  %v156 = vpop.f32.mrf.mxu0
  %v157 = vadd.f32 %v54, %v156
  %158 = vmatmul.f32.gmra.mxu0 %v91
  %v159 = vpop.f32.mrf.mxu0
  %v160 = vadd.f32 %v54, %v159
  %161 = vmatmul.f32.gmra.mxu0 %v94
  %v162 = vpop.f32.mrf.mxu0
  %v163 = vadd.f32 %v54, %v162
  %164 = vmatmul.f32.gmra.mxu0 %v97
  %v165 = vpop.f32.mrf.mxu0
  %v166 = vadd.f32 %v54, %v165
  %167 = vmatmul.f32.gmra.mxu0 %v100
  %v168 = vpop.f32.mrf.mxu0
  %v169 = vadd.f32 %v54, %v168
  %170 = vmatmul.f32.gmra.mxu0 %v103
  %v171 = vpop.f32.mrf.mxu0
  %v172 = vadd.f32 %v54, %v171
  %173 = vdwg.mxu0
  %v174 = vmax.f32 %v127, 0.0
  %v175 = vmax.f32 %v130, 0.0
  %v176 = vmax.f32 %v133, 0.0
  %v177 = vmax.f32 %v136, 0.0
  %v178 = vmax.f32 %v139, 0.0
  %v179 = vmax.f32 %v142, 0.0
  %v180 = vmax.f32 %v145, 0.0
  %v181 = vmax.f32 %v148, 0.0
  %v182 = vmax.f32 %v151, 0.0
  %v183 = vmax.f32 %v154, 0.0
  %v184 = vmax.f32 %v157, 0.0
  %v185 = vmax.f32 %v160, 0.0
  %v186 = vmax.f32 %v163, 0.0
  %v187 = vmax.f32 %v166, 0.0
  %v188 = vmax.f32 %v169, 0.0
  %v189 = vmax.f32 %v172, 0.0
  %v190 = vld [vmem:[%s4] sm:$0xff]
  %v191 = vld [vmem:[%s4 + $0x8] sm:$0xff]
  %v192 = vld [vmem:[%s4 + $0x10] sm:$0xff]
  %v193 = vld [vmem:[%s4 + $0x18] sm:$0xff]
  %v194 = vld [vmem:[%s5] sm:$0x1]
  %v196 = vperm.slane %v194, 0
  %vm198 = vcmask 261120
  %v200 = vsel %vm198, %v174, 0
  %v203 = vsel %vm198, %v175, 0
  %v206 = vsel %vm198, %v176, 0
  %v209 = vsel %vm198, %v177, 0
  %v212 = vsel %vm198, %v178, 0
  %v215 = vsel %vm198, %v179, 0
  %v218 = vsel %vm198, %v180, 0
  %v221 = vsel %vm198, %v181, 0
  %v224 = vsel %vm198, %v182, 0
  %v227 = vsel %vm198, %v183, 0
  %v230 = vsel %vm198, %v184, 0
  %v233 = vsel %vm198, %v185, 0
  %v236 = vsel %vm198, %v186, 0
  %v239 = vsel %vm198, %v187, 0
  %v242 = vsel %vm198, %v188, 0
  %v245 = vsel %vm198, %v189, 0
  %247 = vmatpush.msra.mxu0 0.0
  %248 = vmatpush.msra.mxu0 0.0
  %249 = vmatpush.msra.mxu0 0.0
  %250 = vmatpush.msra.mxu0 0.0
  %251 = vmatpush.msra.mxu0 0.0
  %252 = vmatpush.msra.mxu0 0.0
  %253 = vmatpush.msra.mxu0 0.0
  %254 = vmatpush.msra.mxu0 0.0
  %255 = vmatpush.msra.mxu0 0.0
  %256 = vmatpush.msra.mxu0 0.0
  %257 = vmatpush.msra.mxu0 0.0
  %258 = vmatpush.msra.mxu0 0.0
  %259 = vmatpush.msra.mxu0 %v193
  %260 = vmatpush.msra.mxu0 %v192
  %261 = vmatpush.msra.mxu0 %v191
  %262 = vmatpush.msra.mxu0 %v190
  %263 = vmatmul.f32.gmra.mxu0 %v200
  %v264 = vpop.f32.mrf.mxu0
  %v265 = vadd.f32 %v196, %v264
  %266 = vmatmul.f32.gmra.mxu0 %v203
  %v267 = vpop.f32.mrf.mxu0
  %v268 = vadd.f32 %v196, %v267
  %269 = vmatmul.f32.gmra.mxu0 %v206
  %v270 = vpop.f32.mrf.mxu0
  %v271 = vadd.f32 %v196, %v270
  %272 = vmatmul.f32.gmra.mxu0 %v209
  %v273 = vpop.f32.mrf.mxu0
  %v274 = vadd.f32 %v196, %v273
  %275 = vmatmul.f32.gmra.mxu0 %v212
  %v276 = vpop.f32.mrf.mxu0
  %v277 = vadd.f32 %v196, %v276
  %278 = vmatmul.f32.gmra.mxu0 %v215
  %v279 = vpop.f32.mrf.mxu0
  %v280 = vadd.f32 %v196, %v279
  %281 = vmatmul.f32.gmra.mxu0 %v218
  %v282 = vpop.f32.mrf.mxu0
  %v283 = vadd.f32 %v196, %v282
  %284 = vmatmul.f32.gmra.mxu0 %v221
  %v285 = vpop.f32.mrf.mxu0
  %v286 = vadd.f32 %v196, %v285
  %287 = vmatmul.f32.gmra.mxu0 %v224
  %v288 = vpop.f32.mrf.mxu0
  %v289 = vadd.f32 %v196, %v288
  %290 = vmatmul.f32.gmra.mxu0 %v227
  %v291 = vpop.f32.mrf.mxu0
  %v292 = vadd.f32 %v196, %v291
  %293 = vmatmul.f32.gmra.mxu0 %v230
  %v294 = vpop.f32.mrf.mxu0
  %v295 = vadd.f32 %v196, %v294
  %296 = vmatmul.f32.gmra.mxu0 %v233
  %v297 = vpop.f32.mrf.mxu0
  %v298 = vadd.f32 %v196, %v297
  %299 = vmatmul.f32.gmra.mxu0 %v236
  %v300 = vpop.f32.mrf.mxu0
  %v301 = vadd.f32 %v196, %v300
  %302 = vmatmul.f32.gmra.mxu0 %v239
  %v303 = vpop.f32.mrf.mxu0
  %v304 = vadd.f32 %v196, %v303
  %305 = vmatmul.f32.gmra.mxu0 %v242
  %v306 = vpop.f32.mrf.mxu0
  %v307 = vadd.f32 %v196, %v306
  %308 = vmatmul.f32.gmra.mxu0 %v245
  %v309 = vpop.f32.mrf.mxu0
  %v310 = vadd.f32 %v196, %v309
  %311 = vdwg.mxu0
  %v312 = vmax.f32 %v265, 0.0
  %v313 = vmax.f32 %v268, 0.0
  %v314 = vmax.f32 %v271, 0.0
  %v315 = vmax.f32 %v274, 0.0
  %v316 = vmax.f32 %v277, 0.0
  %v317 = vmax.f32 %v280, 0.0
  %v318 = vmax.f32 %v283, 0.0
  %v319 = vmax.f32 %v286, 0.0
  %v320 = vmax.f32 %v289, 0.0
  %v321 = vmax.f32 %v292, 0.0
  %v322 = vmax.f32 %v295, 0.0
  %v323 = vmax.f32 %v298, 0.0
  %v324 = vmax.f32 %v301, 0.0
  %v325 = vmax.f32 %v304, 0.0
  %v326 = vmax.f32 %v307, 0.0
  %v327 = vmax.f32 %v310, 0.0
  %v328 = vld [vmem:[%s6] sm:$0xff]
  %v329 = vld [vmem:[%s6 + $0x8] sm:$0xff]
  %v330 = vld [vmem:[%s6 + $0x10] sm:$0xff]
  %v331 = vld [vmem:[%s6 + $0x18] sm:$0xff]
  %v332 = vld [vmem:[%s7] sm:$0x1]
  %v334 = vperm.slane %v332, 0
  %352 = vrot.lane.b32.xlu0 %v312, 119
  %v353 = vpop.permute.xlu0 %352
  %354 = vrot.lane.b32.xlu0 %v313, 119
  %v355 = vpop.permute.xlu0 %354
  %356 = vrot.lane.b32.xlu0 %v314, 119
  %v357 = vpop.permute.xlu0 %356
  %358 = vrot.lane.b32.xlu0 %v315, 119
  %v359 = vpop.permute.xlu0 %358
  %360 = vrot.lane.b32.xlu0 %v316, 119
  %v361 = vpop.permute.xlu0 %360
  %362 = vrot.lane.b32.xlu0 %v317, 119
  %v363 = vpop.permute.xlu0 %362
  %364 = vrot.lane.b32.xlu0 %v318, 119
  %v365 = vpop.permute.xlu0 %364
  %366 = vrot.lane.b32.xlu0 %v319, 119
  %v367 = vpop.permute.xlu0 %366
  %368 = vrot.lane.b32.xlu0 %v320, 119
  %v369 = vpop.permute.xlu0 %368
  %370 = vrot.lane.b32.xlu0 %v321, 119
  %v371 = vpop.permute.xlu0 %370
  %372 = vrot.lane.b32.xlu0 %v322, 119
  %v373 = vpop.permute.xlu0 %372
  %374 = vrot.lane.b32.xlu0 %v323, 119
  %v375 = vpop.permute.xlu0 %374
  %376 = vrot.lane.b32.xlu0 %v324, 119
  %v377 = vpop.permute.xlu0 %376
  %378 = vrot.lane.b32.xlu0 %v325, 119
  %v379 = vpop.permute.xlu0 %378
  %380 = vrot.lane.b32.xlu0 %v326, 119
  %v381 = vpop.permute.xlu0 %380
  %382 = vrot.lane.b32.xlu0 %v327, 119
  %v383 = vpop.permute.xlu0 %382
  %v384 = vsel %vm198, %v353, 0
  %v386 = vsel %vm198, %v355, 0
  %v388 = vsel %vm198, %v357, 0
  %v390 = vsel %vm198, %v359, 0
  %v392 = vsel %vm198, %v361, 0
  %v394 = vsel %vm198, %v363, 0
  %v396 = vsel %vm198, %v365, 0
  %v398 = vsel %vm198, %v367, 0
  %v400 = vsel %vm198, %v369, 0
  %v402 = vsel %vm198, %v371, 0
  %v404 = vsel %vm198, %v373, 0
  %v406 = vsel %vm198, %v375, 0
  %v408 = vsel %vm198, %v377, 0
  %v410 = vsel %vm198, %v379, 0
  %v412 = vsel %vm198, %v381, 0
  %v414 = vsel %vm198, %v383, 0
  %416 = vmatpush.msra.mxu0 0.0
  %417 = vmatpush.msra.mxu0 0.0
  %418 = vmatpush.msra.mxu0 0.0
  %419 = vmatpush.msra.mxu0 0.0
  %420 = vmatpush.msra.mxu0 0.0
  %421 = vmatpush.msra.mxu0 0.0
  %422 = vmatpush.msra.mxu0 0.0
  %423 = vmatpush.msra.mxu0 0.0
  %424 = vmatpush.msra.mxu0 0.0
  %425 = vmatpush.msra.mxu0 0.0
  %426 = vmatpush.msra.mxu0 0.0
  %427 = vmatpush.msra.mxu0 0.0
  %428 = vmatpush.msra.mxu0 %v331
  %429 = vmatpush.msra.mxu0 %v330
  %430 = vmatpush.msra.mxu0 %v329
  %431 = vmatpush.msra.mxu0 %v328
  %432 = vmatmul.f32.gmra.mxu0 %v384
  %v433 = vpop.f32.mrf.mxu0
  %v434 = vadd.f32 %v334, %v433
  %435 = vmatmul.f32.gmra.mxu0 %v386
  %v436 = vpop.f32.mrf.mxu0
  %v437 = vadd.f32 %v334, %v436
  %438 = vmatmul.f32.gmra.mxu0 %v388
  %v439 = vpop.f32.mrf.mxu0
  %v440 = vadd.f32 %v334, %v439
  %441 = vmatmul.f32.gmra.mxu0 %v390
  %v442 = vpop.f32.mrf.mxu0
  %v443 = vadd.f32 %v334, %v442
  %444 = vmatmul.f32.gmra.mxu0 %v392
  %v445 = vpop.f32.mrf.mxu0
  %v446 = vadd.f32 %v334, %v445
  %447 = vmatmul.f32.gmra.mxu0 %v394
  %v448 = vpop.f32.mrf.mxu0
  %v449 = vadd.f32 %v334, %v448
  %450 = vmatmul.f32.gmra.mxu0 %v396
  %v451 = vpop.f32.mrf.mxu0
  %v452 = vadd.f32 %v334, %v451
  %453 = vmatmul.f32.gmra.mxu0 %v398
  %v454 = vpop.f32.mrf.mxu0
  %v455 = vadd.f32 %v334, %v454
  %456 = vmatmul.f32.gmra.mxu0 %v400
  %v457 = vpop.f32.mrf.mxu0
  %v458 = vadd.f32 %v334, %v457
  %459 = vmatmul.f32.gmra.mxu0 %v402
  %v460 = vpop.f32.mrf.mxu0
  %v461 = vadd.f32 %v334, %v460
  %462 = vmatmul.f32.gmra.mxu0 %v404
  %v463 = vpop.f32.mrf.mxu0
  %v464 = vadd.f32 %v334, %v463
  %465 = vmatmul.f32.gmra.mxu0 %v406
  %v466 = vpop.f32.mrf.mxu0
  %v467 = vadd.f32 %v334, %v466
  %468 = vmatmul.f32.gmra.mxu0 %v408
  %v469 = vpop.f32.mrf.mxu0
  %v470 = vadd.f32 %v334, %v469
  %471 = vmatmul.f32.gmra.mxu0 %v410
  %v472 = vpop.f32.mrf.mxu0
  %v473 = vadd.f32 %v334, %v472
  %474 = vmatmul.f32.gmra.mxu0 %v412
  %v475 = vpop.f32.mrf.mxu0
  %v476 = vadd.f32 %v334, %v475
  %477 = vmatmul.f32.gmra.mxu0 %v414
  %v478 = vpop.f32.mrf.mxu0
  %v479 = vadd.f32 %v334, %v478
  %480 = vdwg.mxu0
  %v481 = vmax.f32 %v434, 0.0
  %v482 = vmax.f32 %v437, 0.0
  %v483 = vmax.f32 %v440, 0.0
  %v484 = vmax.f32 %v443, 0.0
  %v485 = vmax.f32 %v446, 0.0
  %v486 = vmax.f32 %v449, 0.0
  %v487 = vmax.f32 %v452, 0.0
  %v488 = vmax.f32 %v455, 0.0
  %v489 = vmax.f32 %v458, 0.0
  %v490 = vmax.f32 %v461, 0.0
  %v491 = vmax.f32 %v464, 0.0
  %v492 = vmax.f32 %v467, 0.0
  %v493 = vmax.f32 %v470, 0.0
  %v494 = vmax.f32 %v473, 0.0
  %v495 = vmax.f32 %v476, 0.0
  %v496 = vmax.f32 %v479, 0.0
  %v497 = vld [vmem:[%s8] sm:$0xff]
  %v498 = vld [vmem:[%s8 + $0x8] sm:$0xff]
  %v499 = vld [vmem:[%s8 + $0x10] sm:$0xff]
  %v500 = vld [vmem:[%s8 + $0x18] sm:$0xff]
  %v501 = vld [vmem:[%s9] sm:$0x1]
  %v503 = vperm.slane %v501, 0
  %v506 = vsel %vm198, %v481, 0
  %v509 = vsel %vm198, %v482, 0
  %v512 = vsel %vm198, %v483, 0
  %v515 = vsel %vm198, %v484, 0
  %v518 = vsel %vm198, %v485, 0
  %v521 = vsel %vm198, %v486, 0
  %v524 = vsel %vm198, %v487, 0
  %v527 = vsel %vm198, %v488, 0
  %v530 = vsel %vm198, %v489, 0
  %v533 = vsel %vm198, %v490, 0
  %v536 = vsel %vm198, %v491, 0
  %v539 = vsel %vm198, %v492, 0
  %v542 = vsel %vm198, %v493, 0
  %v545 = vsel %vm198, %v494, 0
  %v548 = vsel %vm198, %v495, 0
  %v551 = vsel %vm198, %v496, 0
  %553 = vmatpush.msra.mxu0 0.0
  %554 = vmatpush.msra.mxu0 0.0
  %555 = vmatpush.msra.mxu0 0.0
  %556 = vmatpush.msra.mxu0 0.0
  %557 = vmatpush.msra.mxu0 0.0
  %558 = vmatpush.msra.mxu0 0.0
  %559 = vmatpush.msra.mxu0 0.0
  %560 = vmatpush.msra.mxu0 0.0
  %561 = vmatpush.msra.mxu0 0.0
  %562 = vmatpush.msra.mxu0 0.0
  %563 = vmatpush.msra.mxu0 0.0
  %564 = vmatpush.msra.mxu0 0.0
  %565 = vmatpush.msra.mxu0 %v500
  %566 = vmatpush.msra.mxu0 %v499
  %567 = vmatpush.msra.mxu0 %v498
  %568 = vmatpush.msra.mxu0 %v497
  %569 = vmatmul.f32.gmra.mxu0 %v506
  %v570 = vpop.f32.mrf.mxu0
  %v571 = vadd.f32 %v503, %v570
  %572 = vmatmul.f32.gmra.mxu0 %v509
  %v573 = vpop.f32.mrf.mxu0
  %v574 = vadd.f32 %v503, %v573
  %575 = vmatmul.f32.gmra.mxu0 %v512
  %v576 = vpop.f32.mrf.mxu0
  %v577 = vadd.f32 %v503, %v576
  %578 = vmatmul.f32.gmra.mxu0 %v515
  %v579 = vpop.f32.mrf.mxu0
  %v580 = vadd.f32 %v503, %v579
  %581 = vmatmul.f32.gmra.mxu0 %v518
  %v582 = vpop.f32.mrf.mxu0
  %v583 = vadd.f32 %v503, %v582
  %584 = vmatmul.f32.gmra.mxu0 %v521
  %v585 = vpop.f32.mrf.mxu0
  %v586 = vadd.f32 %v503, %v585
  %587 = vmatmul.f32.gmra.mxu0 %v524
  %v588 = vpop.f32.mrf.mxu0
  %v589 = vadd.f32 %v503, %v588
  %590 = vmatmul.f32.gmra.mxu0 %v527
  %v591 = vpop.f32.mrf.mxu0
  %v592 = vadd.f32 %v503, %v591
  %593 = vmatmul.f32.gmra.mxu0 %v530
  %v594 = vpop.f32.mrf.mxu0
  %v595 = vadd.f32 %v503, %v594
  %596 = vmatmul.f32.gmra.mxu0 %v533
  %v597 = vpop.f32.mrf.mxu0
  %v598 = vadd.f32 %v503, %v597
  %599 = vmatmul.f32.gmra.mxu0 %v536
  %v600 = vpop.f32.mrf.mxu0
  %v601 = vadd.f32 %v503, %v600
  %602 = vmatmul.f32.gmra.mxu0 %v539
  %v603 = vpop.f32.mrf.mxu0
  %v604 = vadd.f32 %v503, %v603
  %605 = vmatmul.f32.gmra.mxu0 %v542
  %v606 = vpop.f32.mrf.mxu0
  %v607 = vadd.f32 %v503, %v606
  %608 = vmatmul.f32.gmra.mxu0 %v545
  %v609 = vpop.f32.mrf.mxu0
  %v610 = vadd.f32 %v503, %v609
  %611 = vmatmul.f32.gmra.mxu0 %v548
  %v612 = vpop.f32.mrf.mxu0
  %v613 = vadd.f32 %v503, %v612
  %614 = vmatmul.f32.gmra.mxu0 %v551
  %v615 = vpop.f32.mrf.mxu0
  %v616 = vadd.f32 %v503, %v615
  %617 = vdwg.mxu0
  %v618 = vld [vmem:[%s1] sm:$0xff]
  %v619 = vld [vmem:[%s1 + $0x8] sm:$0xff]
  %v620 = vld [vmem:[%s1 + $0x10] sm:$0xff]
  %v621 = vld [vmem:[%s1 + $0x18] sm:$0xff]
  %v622 = vld [vmem:[%s1 + $0x20] sm:$0xff]
  %v623 = vld [vmem:[%s1 + $0x28] sm:$0xff]
  %v624 = vld [vmem:[%s1 + $0x30] sm:$0xff]
  %v625 = vld [vmem:[%s1 + $0x38] sm:$0xff]
  %v626 = vld [vmem:[%s1 + $0x40] sm:$0xff]
  %v627 = vld [vmem:[%s1 + $0x48] sm:$0xff]
  %v628 = vld [vmem:[%s1 + $0x50] sm:$0xff]
  %v629 = vld [vmem:[%s1 + $0x58] sm:$0xff]
  %v630 = vld [vmem:[%s1 + $0x60] sm:$0xff]
  %v631 = vld [vmem:[%s1 + $0x68] sm:$0xff]
  %v632 = vld [vmem:[%s1 + $0x70] sm:$0xff]
  %v633 = vld [vmem:[%s1 + $0x78] sm:$0xff]
  %v634 = vadd.f32 %v618, %v571
  %v635 = vadd.f32 %v619, %v574
  %v636 = vadd.f32 %v620, %v577
  %v637 = vadd.f32 %v621, %v580
  %v638 = vadd.f32 %v622, %v583
  %v639 = vadd.f32 %v623, %v586
  %v640 = vadd.f32 %v624, %v589
  %v641 = vadd.f32 %v625, %v592
  %v642 = vadd.f32 %v626, %v595
  %v643 = vadd.f32 %v627, %v598
  %v644 = vadd.f32 %v628, %v601
  %v645 = vadd.f32 %v629, %v604
  %v646 = vadd.f32 %v630, %v607
  %v647 = vadd.f32 %v631, %v610
  %v648 = vadd.f32 %v632, %v613
  %v649 = vadd.f32 %v633, %v616
  %vm650 = vcmask 130048
  %651 = vst.msk [vmem:[%s10] sm:$0xff] %vm650, 0.0
  %652 = vst.msk [vmem:[%s10 + $0x8] sm:$0xff] %vm650, 0.0
  %653 = vst.msk [vmem:[%s10 + $0x10] sm:$0xff] %vm650, 0.0
  %654 = vst.msk [vmem:[%s10 + $0x18] sm:$0xff] %vm650, 0.0
  %655 = vst.msk [vmem:[%s10 + $0x20] sm:$0xff] %vm650, 0.0
  %656 = vst.msk [vmem:[%s10 + $0x28] sm:$0xff] %vm650, 0.0
  %657 = vst.msk [vmem:[%s10 + $0x30] sm:$0xff] %vm650, 0.0
  %658 = vst.msk [vmem:[%s10 + $0x38] sm:$0xff] %vm650, 0.0
  %659 = vst.msk [vmem:[%s10 + $0x40] sm:$0xff] %vm650, 0.0
  %660 = vst.msk [vmem:[%s10 + $0x48] sm:$0xff] %vm650, 0.0
  %661 = vst.msk [vmem:[%s10 + $0x50] sm:$0xff] %vm650, 0.0
  %662 = vst.msk [vmem:[%s10 + $0x58] sm:$0xff] %vm650, 0.0
  %663 = vst.msk [vmem:[%s10 + $0x60] sm:$0xff] %vm650, 0.0
  %664 = vst.msk [vmem:[%s10 + $0x68] sm:$0xff] %vm650, 0.0
  %665 = vst.msk [vmem:[%s10 + $0x70] sm:$0xff] %vm650, 0.0
  %666 = vst.msk [vmem:[%s10 + $0x78] sm:$0xff] %vm650, 0.0
  %vm667 = vcmask 72704
  %668 = vst.msk [vmem:[%s10] sm:$0xff] %vm667, %v265
  %669 = vst.msk [vmem:[%s10 + $0x8] sm:$0xff] %vm667, %v268
  %670 = vst.msk [vmem:[%s10 + $0x10] sm:$0xff] %vm667, %v271
  %671 = vst.msk [vmem:[%s10 + $0x18] sm:$0xff] %vm667, %v274
  %672 = vst.msk [vmem:[%s10 + $0x20] sm:$0xff] %vm667, %v277
  %673 = vst.msk [vmem:[%s10 + $0x28] sm:$0xff] %vm667, %v280
  %674 = vst.msk [vmem:[%s10 + $0x30] sm:$0xff] %vm667, %v283
  %675 = vst.msk [vmem:[%s10 + $0x38] sm:$0xff] %vm667, %v286
  %676 = vst.msk [vmem:[%s10 + $0x40] sm:$0xff] %vm667, %v289
  %677 = vst.msk [vmem:[%s10 + $0x48] sm:$0xff] %vm667, %v292
  %678 = vst.msk [vmem:[%s10 + $0x50] sm:$0xff] %vm667, %v295
  %679 = vst.msk [vmem:[%s10 + $0x58] sm:$0xff] %vm667, %v298
  %680 = vst.msk [vmem:[%s10 + $0x60] sm:$0xff] %vm667, %v301
  %681 = vst.msk [vmem:[%s10 + $0x68] sm:$0xff] %vm667, %v304
  %682 = vst.msk [vmem:[%s10 + $0x70] sm:$0xff] %vm667, %v307
  %683 = vst.msk [vmem:[%s10 + $0x78] sm:$0xff] %vm667, %v310
  %700 = vrot.lane.b32.xlu0 %v634, 9
  %v701 = vpop.permute.xlu0 %700
  %702 = vrot.lane.b32.xlu0 %v635, 9
  %v703 = vpop.permute.xlu0 %702
  %704 = vrot.lane.b32.xlu0 %v636, 9
  %v705 = vpop.permute.xlu0 %704
  %706 = vrot.lane.b32.xlu0 %v637, 9
  %v707 = vpop.permute.xlu0 %706
  %708 = vrot.lane.b32.xlu0 %v638, 9
  %v709 = vpop.permute.xlu0 %708
  %710 = vrot.lane.b32.xlu0 %v639, 9
  %v711 = vpop.permute.xlu0 %710
  %712 = vrot.lane.b32.xlu0 %v640, 9
  %v713 = vpop.permute.xlu0 %712
  %714 = vrot.lane.b32.xlu0 %v641, 9
  %v715 = vpop.permute.xlu0 %714
  %716 = vrot.lane.b32.xlu0 %v642, 9
  %v717 = vpop.permute.xlu0 %716
  %718 = vrot.lane.b32.xlu0 %v643, 9
  %v719 = vpop.permute.xlu0 %718
  %720 = vrot.lane.b32.xlu0 %v644, 9
  %v721 = vpop.permute.xlu0 %720
  %722 = vrot.lane.b32.xlu0 %v645, 9
  %v723 = vpop.permute.xlu0 %722
  %724 = vrot.lane.b32.xlu0 %v646, 9
  %v725 = vpop.permute.xlu0 %724
  %726 = vrot.lane.b32.xlu0 %v647, 9
  %v727 = vpop.permute.xlu0 %726
  %728 = vrot.lane.b32.xlu0 %v648, 9
  %v729 = vpop.permute.xlu0 %728
  %730 = vrot.lane.b32.xlu0 %v649, 9
  %v731 = vpop.permute.xlu0 %730
  %vm748 = vcmask 97352
  %749 = vst.msk [vmem:[%s10] sm:$0xff] %vm748, %v701
  %750 = vst.msk [vmem:[%s10 + $0x8] sm:$0xff] %vm748, %v703
  %751 = vst.msk [vmem:[%s10 + $0x10] sm:$0xff] %vm748, %v705
  %752 = vst.msk [vmem:[%s10 + $0x18] sm:$0xff] %vm748, %v707
  %753 = vst.msk [vmem:[%s10 + $0x20] sm:$0xff] %vm748, %v709
  %754 = vst.msk [vmem:[%s10 + $0x28] sm:$0xff] %vm748, %v711
  %755 = vst.msk [vmem:[%s10 + $0x30] sm:$0xff] %vm748, %v713
  %756 = vst.msk [vmem:[%s10 + $0x38] sm:$0xff] %vm748, %v715
  %757 = vst.msk [vmem:[%s10 + $0x40] sm:$0xff] %vm748, %v717
  %758 = vst.msk [vmem:[%s10 + $0x48] sm:$0xff] %vm748, %v719
  %759 = vst.msk [vmem:[%s10 + $0x50] sm:$0xff] %vm748, %v721
  %760 = vst.msk [vmem:[%s10 + $0x58] sm:$0xff] %vm748, %v723
  %761 = vst.msk [vmem:[%s10 + $0x60] sm:$0xff] %vm748, %v725
  %762 = vst.msk [vmem:[%s10 + $0x68] sm:$0xff] %vm748, %v727
  %763 = vst.msk [vmem:[%s10 + $0x70] sm:$0xff] %vm748, %v729
  %764 = vst.msk [vmem:[%s10 + $0x78] sm:$0xff] %vm748, %v731
  // Predicated region
  $region42: #{tpu_custom_call.1} parent=0 // pred_check
    _
  $region43: #{tpu_custom_call.1} parent=0 // pred_check_branch
    %766 = sbr.rel (0) target = $region45
  $region44: #{tpu_custom_call.1} parent=0 // pred_region
    _
  $region45: #{tpu_custom_call.1} parent=0 // pred_fallthru
    _
  // Predicated region
  $region46: #{tpu_custom_call.1} parent=0 // pred_check
    _
  $region47: #{tpu_custom_call.1} parent=0 // pred_check_branch
    %768 = sbr.rel (0) target = $region49
  $region48: #{tpu_custom_call.1} parent=0 // pred_region
    _
  $region49: #{tpu_custom_call.1} parent=0 // pred_fallthru
    _

</llo_original>
